<compile_context>
chip_gen: v7x
topology: tpu7x:2x2x1
jax: 0.10.0
libtpu: 0.0.40
codegen_flags: <defaults>
</compile_context>

<pallas_src>
import jax
import jax.numpy as jnp
from jax.experimental import pallas as pl
from jax.experimental.pallas import tpu as pltpu


def _round_up(v, m):
    return ((v + m - 1) // m) * m


def _fused_gin_kernel(adj_ref, x_in_ref, w1_ref, b1_ref, w2_ref, b2_ref,
                      out_ref, xa_ref, xb_ref):
    """One grid step = (layer l, destination-row tile r)."""
    l = pl.program_id(0)
    r = pl.program_id(1)
    tile_n = out_ref.shape[0]

    # Load the (padded, bf16) input node features into ping-pong slot A once.
    @pl.when(jnp.logical_and(l == 0, r == 0))
    def _():
        xa_ref[...] = x_in_ref[...]

    # Even layers read slot A / write slot B; odd layers the opposite.
    read_a = (l % 2) == 0

    # Full source features for this layer (dense aggregation needs every source row).
    x_src = jnp.where(read_a, xa_ref[...], xb_ref[...])

    # Aggregation: (1+eps)*x_i + sum_{j->i} x_j.  The self term is folded into the
    # adjacency diagonal in the wrapper, so this is a single bf16 MXU matmul.
    agg = jnp.dot(adj_ref[...], x_src, preferred_element_type=jnp.float32)

    # GIN MLP: Linear -> ReLU -> Linear, then the encoder-level ReLU.
    h1 = jnp.dot(agg.astype(jnp.bfloat16), w1_ref[0],
                 preferred_element_type=jnp.float32) + b1_ref[0]
    h1 = jnp.maximum(h1, 0.0)
    h2 = jnp.dot(h1.astype(jnp.bfloat16), w2_ref[0],
                 preferred_element_type=jnp.float32) + b2_ref[0]
    h2 = jnp.maximum(h2, 0.0)

    # Stash this layer's output rows into the other ping-pong slot for layer l+1.
    h2_bf = h2.astype(jnp.bfloat16)
    row0 = pl.multiple_of(r * tile_n, tile_n)

    @pl.when(read_a)
    def _():
        xb_ref[pl.ds(row0, tile_n), :] = h2_bf

    @pl.when(jnp.logical_not(read_a))
    def _():
        xa_ref[pl.ds(row0, tile_n), :] = h2_bf

    # The last layer's stores win (same output block is revisited per layer).
    out_ref[...] = h2


def encoder_forward(params, x, edge_index, batch_size, framework,
                    eps=0.0, tile_n=128):
    """Pallas implementation of EncoderWithoutFlexFrontsGIN.forward (fused layers)."""
    n, c_in = x.shape
    num_layers = len(params)
    c_out_real = params[-1][2].shape[1]

    # Lane-pad channels and nodes to multiples of 128.
    all_dims = [c_in]
    for (w1, _, w2, _) in params:
        all_dims += [w1.shape[0], w1.shape[1], w2.shape[0], w2.shape[1]]
    c_pad = _round_up(max(all_dims), 128)
    n_pad = _round_up(n, 128)
    tile_n = min(tile_n, n_pad)
    if n_pad % tile_n != 0:
        tile_n = 128
    num_row_tiles = n_pad // tile_n

    # Zero-padded per-layer weight stacks (bf16 matmul operands, f32 biases).
    w1s = jnp.zeros((num_layers, c_pad, c_pad), jnp.bfloat16)
    b1s = jnp.zeros((num_layers, 1, c_pad), jnp.float32)
    w2s = jnp.zeros((num_layers, c_pad, c_pad), jnp.bfloat16)
    b2s = jnp.zeros((num_layers, 1, c_pad), jnp.float32)
    for i, (w1, b1, w2, b2) in enumerate(params):
        w1s = w1s.at[i, :w1.shape[0], :w1.shape[1]].set(w1.astype(jnp.bfloat16))
        b1s = b1s.at[i, :, :b1.shape[1]].set(b1.astype(jnp.float32))
        w2s = w2s.at[i, :w2.shape[0], :w2.shape[1]].set(w2.astype(jnp.bfloat16))
        b2s = b2s.at[i, :, :b2.shape[1]].set(b2.astype(jnp.float32))

    # Dense adjacency A[dst, src] = #edges (PyG "source_to_target" flow), with the
    # (1+eps)*x_i self contribution folded onto the diagonal.  Counts are exact in bf16.
    src = edge_index[0]
    dst = edge_index[1]
    adj = jnp.zeros((n_pad, n_pad), jnp.float32)
    adj = adj.at[dst, src].add(1.0)
    adj = adj.at[jnp.arange(n), jnp.arange(n)].add(1.0 + eps)
    adj = adj.astype(jnp.bfloat16)

    x_p = jnp.zeros((n_pad, c_pad), jnp.bfloat16)
    x_p = x_p.at[:n, :c_in].set(x.astype(jnp.bfloat16))

    out_pad = pl.pallas_call(
        _fused_gin_kernel,
        out_shape=jax.ShapeDtypeStruct((n_pad, c_pad), jnp.float32),
        grid_spec=pltpu.PrefetchScalarGridSpec(
            num_scalar_prefetch=0,
            grid=(num_layers, num_row_tiles),
            in_specs=[
                # adjacency row tile (resident when num_row_tiles == 1)
                pl.BlockSpec((tile_n, n_pad), lambda l, r: (r, 0)),
                # input features: fetched once, VMEM-resident
                pl.BlockSpec((n_pad, c_pad), lambda l, r: (0, 0)),
                # per-layer weight / bias slices
                pl.BlockSpec((1, c_pad, c_pad), lambda l, r: (l, 0, 0)),
                pl.BlockSpec((1, 1, c_pad), lambda l, r: (l, 0, 0)),
                pl.BlockSpec((1, c_pad, c_pad), lambda l, r: (l, 0, 0)),
                pl.BlockSpec((1, 1, c_pad), lambda l, r: (l, 0, 0)),
            ],
            out_specs=pl.BlockSpec((tile_n, c_pad), lambda l, r: (r, 0)),
            scratch_shapes=[
                pltpu.VMEM((n_pad, c_pad), jnp.bfloat16),  # ping-pong slot A
                pltpu.VMEM((n_pad, c_pad), jnp.bfloat16),  # ping-pong slot B
            ],
        ),
        compiler_params=pltpu.CompilerParams(
            dimension_semantics=("arbitrary", "arbitrary"),
            vmem_limit_bytes=32 * 1024 * 1024,
        ),
    )(adj, x_p, w1s, b1s, w2s, b2s)

    out = out_pad[:n, :c_out_real]
    if framework:
        return out
    return out[:batch_size]


def init_linear(key, fan_in, fan_out):
    # PyTorch nn.Linear default init: U(-1/sqrt(fan_in), 1/sqrt(fan_in)).
    kw, kb = jax.random.split(key)
    bound = 1.0 / jnp.sqrt(jnp.float32(fan_in))
    w = jax.random.uniform(kw, (fan_in, fan_out), jnp.float32, -bound, bound)
    b = jax.random.uniform(kb, (1, fan_out), jnp.float32, -bound, bound)
    return w, b


def init_encoder_params(key, input_channels, hidden_channels, output_channels, layers):
    params = []
    dims = [(input_channels, hidden_channels, hidden_channels)]
    dims += [(hidden_channels, hidden_channels, hidden_channels)] * (layers - 2)
    dims += [(hidden_channels, output_channels, output_channels)]
    for (c_in, c_mid, c_out) in dims:
        key, k1, k2 = jax.random.split(key, 3)
        w1, b1 = init_linear(k1, c_in, c_mid)
        w2, b2 = init_linear(k2, c_mid, c_out)
        params.append((w1, b1, w2, b2))
    return params


def encoder_forward_ref(params, x, edge_index, batch_size, framework):
    """Pure-JAX f32 reference for correctness check."""
    n = x.shape[0]
    adj = jnp.zeros((n, n), jnp.float32).at[edge_index[1], edge_index[0]].add(1.0)
    for (w1, b1, w2, b2) in params:
        h = x + adj @ x
        h = jnp.maximum(h @ w1 + b1, 0.0)
        h = h @ w2 + b2
        x = jnp.maximum(h, 0.0)
    return x if framework else x[:batch_size]


if __name__ == "__main__":
    key = jax.random.PRNGKey(0)
    k_x, k_e, k_p = jax.random.split(key, 3)

    # Small, module-consistent shapes.
    num_nodes = 16
    input_channels = 8
    hidden_channels = 32
    output_channels = 32
    num_layers = 3
    num_edges = 40
    batch_size = 8
    framework = False

    x = jax.random.normal(k_x, (num_nodes, input_channels), jnp.float32)
    edge_index = jax.random.randint(k_e, (2, num_edges), 0, num_nodes, jnp.int32)

    params = init_encoder_params(
        k_p, input_channels, hidden_channels, output_channels, num_layers
    )

    out = encoder_forward(params, x, edge_index, batch_size, framework)
    out = jax.block_until_ready(out)

    ref = encoder_forward_ref(params, x, edge_index, batch_size, framework)
    assert out.shape == (batch_size, output_channels)
    # bf16 MXU operands -> loosened tolerance vs the pure-f32 reference.
    assert jnp.allclose(out, ref, atol=5e-2, rtol=5e-2), float(
        jnp.max(jnp.abs(out - ref))
    )

    print("KERNEL_OK")
</pallas_src>

<mosaic_0001>
module attributes {stable_mosaic.version = 11 : i64} {
  func.func @_fused_gin_kernel(%arg0: i32, %arg1: i32, %arg2: memref<128x128xbf16, #tpu.memory_space<vmem>>, %arg3: memref<128x128xbf16, #tpu.memory_space<vmem>>, %arg4: memref<1x128x128xbf16, #tpu.memory_space<vmem>>, %arg5: memref<1x1x128xf32, #tpu.memory_space<vmem>>, %arg6: memref<1x128x128xbf16, #tpu.memory_space<vmem>>, %arg7: memref<1x1x128xf32, #tpu.memory_space<vmem>>, %arg8: memref<128x128xf32, #tpu.memory_space<vmem>>, %arg9: memref<128x128xbf16, #tpu.memory_space<vmem>>, %arg10: memref<128x128xbf16, #tpu.memory_space<vmem>>) attributes {dimension_semantics = [#tpu.dimension_semantics<arbitrary>, #tpu.dimension_semantics<arbitrary>], iteration_bounds = array<i64: 3, 1>, scalar_prefetch = 0 : i64, scratch_operands = 2 : i64, tpu.core_type = #tpu.core_type<tc>, window_params = [{transform_indices = @transform_0, window_bounds = array<i64: 128, 128>}, {pipeline_mode = #tpu.pipeline_mode<synchronous>, transform_indices = @transform_1, window_bounds = array<i64: 128, 128>}, {transform_indices = @transform_2, window_bounds = array<i64: 1, 128, 128>}, {transform_indices = @transform_3, window_bounds = array<i64: 1, 1, 128>}, {transform_indices = @transform_4, window_bounds = array<i64: 1, 128, 128>}, {transform_indices = @transform_5, window_bounds = array<i64: 1, 1, 128>}, {transform_indices = @transform_6, window_bounds = array<i64: 128, 128>}]} {
    %c0_i32 = arith.constant 0 : i32
    %0 = arith.cmpi eq, %arg0, %c0_i32 : i32
    %c0_i32_0 = arith.constant 0 : i32
    %1 = arith.cmpi eq, %arg1, %c0_i32_0 : i32
    %2 = arith.andi %0, %1 : i1
    %3 = arith.extui %2 : i1 to i32
    %c0_i32_1 = arith.constant 0 : i32
    %4 = arith.cmpi ne, %3, %c0_i32_1 : i32
    scf.if %4 {
      %c0_32 = arith.constant 0 : index
      %c0_33 = arith.constant 0 : index
      %50 = vector.load %arg3[%c0_32, %c0_33] : memref<128x128xbf16, #tpu.memory_space<vmem>>, vector<128x128xbf16>
      %c0_34 = arith.constant 0 : index
      %c0_35 = arith.constant 0 : index
      %51 = vector.load %arg9[%c0_34, %c0_35] : memref<128x128xbf16, #tpu.memory_space<vmem>>, vector<128x128xbf16>
      tpu.vector_store %arg9[%c0_34, %c0_35], %50 {strides = array<i32>} : memref<128x128xbf16, #tpu.memory_space<vmem>>, vector<128x128xbf16>,
    } else {
    }
    %c2_i32 = arith.constant 2 : i32
    %c0_i32_2 = arith.constant 0 : i32
    %5 = arith.cmpi eq, %c2_i32, %c0_i32_2 : i32
    %c1_i32 = arith.constant 1 : i32
    %6 = arith.select %5, %c1_i32, %c2_i32 : i32
    %7 = arith.remsi %arg0, %6 : i32
    %c0_i32_3 = arith.constant 0 : i32
    %8 = arith.cmpi ne, %7, %c0_i32_3 : i32
    %c0_i32_4 = arith.constant 0 : i32
    %9 = arith.cmpi slt, %7, %c0_i32_4 : i32
    %c0_i32_5 = arith.constant 0 : i32
    %10 = arith.cmpi slt, %6, %c0_i32_5 : i32
    %11 = arith.xori %9, %10 : i1
    %12 = arith.andi %11, %8 : i1
    %13 = arith.addi %7, %6 : i32
    %14 = arith.select %12, %13, %7 : i32
    %c0_i32_6 = arith.constant 0 : i32
    %15 = arith.cmpi eq, %14, %c0_i32_6 : i32
    %c0 = arith.constant 0 : index
    %c0_7 = arith.constant 0 : index
    %16 = vector.load %arg9[%c0, %c0_7] : memref<128x128xbf16, #tpu.memory_space<vmem>>, vector<128x128xbf16>
    %c0_8 = arith.constant 0 : index
    %c0_9 = arith.constant 0 : index
    %17 = vector.load %arg10[%c0_8, %c0_9] : memref<128x128xbf16, #tpu.memory_space<vmem>>, vector<128x128xbf16>
    %18 = arith.select %15, %16, %17 : vector<128x128xbf16>
    %c0_10 = arith.constant 0 : index
    %c0_11 = arith.constant 0 : index
    %19 = vector.load %arg2[%c0_10, %c0_11] : memref<128x128xbf16, #tpu.memory_space<vmem>>, vector<128x128xbf16>
    %cst = arith.constant dense<0.000000e+00> : vector<128x128xf32>
    %20 = tpu.matmul %19, %18, %cst {dimension_numbers = #tpu.dot_dimension_numbers<[1], [0], [0], [1], [0, 0, 1, 1], [], []>} : vector<128x128xbf16>, vector<128x128xbf16>, vector<128x128xf32> -> vector<128x128xf32>
    %21 = arith.truncf %20 : vector<128x128xf32> to vector<128x128xbf16>
    %c0_12 = arith.constant 0 : index
    %c0_13 = arith.constant 0 : index
    %c0_14 = arith.constant 0 : index
    %22 = vector.load %arg4[%c0_12, %c0_13, %c0_14] : memref<1x128x128xbf16, #tpu.memory_space<vmem>>, vector<1x128x128xbf16>
    %23 = vector.shape_cast %22 : vector<1x128x128xbf16> to vector<128x128xbf16>
    %cst_15 = arith.constant dense<0.000000e+00> : vector<128x128xf32>
    %24 = tpu.matmul %21, %23, %cst_15 {dimension_numbers = #tpu.dot_dimension_numbers<[1], [0], [0], [1], [0, 0, 1, 1], [], []>} : vector<128x128xbf16>, vector<128x128xbf16>, vector<128x128xf32> -> vector<128x128xf32>
    %c0_16 = arith.constant 0 : index
    %c0_17 = arith.constant 0 : index
    %c0_18 = arith.constant 0 : index
    %25 = vector.load %arg5[%c0_16, %c0_17, %c0_18] : memref<1x1x128xf32, #tpu.memory_space<vmem>>, vector<1x1x128xf32>
    %26 = vector.shape_cast %25 : vector<1x1x128xf32> to vector<1x128xf32>
    %27 = vector.broadcast %26 : vector<1x128xf32> to vector<128x128xf32>
    %28 = arith.addf %24, %27 : vector<128x128xf32>
    %cst_19 = arith.constant 0.000000e+00 : f32
    %29 = vector.broadcast %cst_19 : f32 to vector<128x128xf32>
    %30 = arith.maximumf %28, %29 : vector<128x128xf32>
    %31 = arith.truncf %30 : vector<128x128xf32> to vector<128x128xbf16>
    %c0_20 = arith.constant 0 : index
    %c0_21 = arith.constant 0 : index
    %c0_22 = arith.constant 0 : index
    %32 = vector.load %arg6[%c0_20, %c0_21, %c0_22] : memref<1x128x128xbf16, #tpu.memory_space<vmem>>, vector<1x128x128xbf16>
    %33 = vector.shape_cast %32 : vector<1x128x128xbf16> to vector<128x128xbf16>
    %cst_23 = arith.constant dense<0.000000e+00> : vector<128x128xf32>
    %34 = tpu.matmul %31, %33, %cst_23 {dimension_numbers = #tpu.dot_dimension_numbers<[1], [0], [0], [1], [0, 0, 1, 1], [], []>} : vector<128x128xbf16>, vector<128x128xbf16>, vector<128x128xf32> -> vector<128x128xf32>
    %c0_24 = arith.constant 0 : index
    %c0_25 = arith.constant 0 : index
    %c0_26 = arith.constant 0 : index
    %35 = vector.load %arg7[%c0_24, %c0_25, %c0_26] : memref<1x1x128xf32, #tpu.memory_space<vmem>>, vector<1x1x128xf32>
    %36 = vector.shape_cast %35 : vector<1x1x128xf32> to vector<1x128xf32>
    %37 = vector.broadcast %36 : vector<1x128xf32> to vector<128x128xf32>
    %38 = arith.addf %34, %37 : vector<128x128xf32>
    %cst_27 = arith.constant 0.000000e+00 : f32
    %39 = vector.broadcast %cst_27 : f32 to vector<128x128xf32>
    %40 = arith.maximumf %38, %39 : vector<128x128xf32>
    %41 = arith.truncf %40 : vector<128x128xf32> to vector<128x128xbf16>
    %c128_i32 = arith.constant 128 : i32
    %42 = arith.muli %arg1, %c128_i32 : i32
    %43 = tpu.assume_multiple %42, 128 : i32
    %44 = arith.extui %15 : i1 to i32
    %c0_i32_28 = arith.constant 0 : i32
    %45 = arith.cmpi ne, %44, %c0_i32_28 : i32
    scf.if %45 {
      %50 = arith.index_cast %43 : i32 to index
      %c0_32 = arith.constant 0 : index
      %51 = vector.load %arg10[%50, %c0_32] : memref<128x128xbf16, #tpu.memory_space<vmem>>, vector<128x128xbf16>
      tpu.vector_store %arg10[%50, %c0_32], %41 {strides = array<i32>} : memref<128x128xbf16, #tpu.memory_space<vmem>>, vector<128x128xbf16>,
    } else {
    }
    %true = arith.constant true
    %46 = arith.xori %15, %true : i1
    %47 = arith.extui %46 : i1 to i32
    %c0_i32_29 = arith.constant 0 : i32
    %48 = arith.cmpi ne, %47, %c0_i32_29 : i32
    scf.if %48 {
      %50 = arith.index_cast %43 : i32 to index
      %c0_32 = arith.constant 0 : index
      %51 = vector.load %arg9[%50, %c0_32] : memref<128x128xbf16, #tpu.memory_space<vmem>>, vector<128x128xbf16>
      tpu.vector_store %arg9[%50, %c0_32], %41 {strides = array<i32>} : memref<128x128xbf16, #tpu.memory_space<vmem>>, vector<128x128xbf16>,
    } else {
    }
    %c0_30 = arith.constant 0 : index
    %c0_31 = arith.constant 0 : index
    %49 = vector.load %arg8[%c0_30, %c0_31] : memref<128x128xf32, #tpu.memory_space<vmem>>, vector<128x128xf32>
    tpu.vector_store %arg8[%c0_30, %c0_31], %40 {strides = array<i32>} : memref<128x128xf32, #tpu.memory_space<vmem>>, vector<128x128xf32>,
    return
  }
  func.func @transform_0(%arg0: i32, %arg1: i32) -> (i32, i32) {
    %c0_i32 = arith.constant 0 : i32
    %c0_i32_0 = arith.constant 0 : i32
    return %arg1, %c0_i32 : i32, i32
  }
  func.func @transform_1(%arg0: i32, %arg1: i32) -> (i32, i32) {
    %c0_i32 = arith.constant 0 : i32
    %c0_i32_0 = arith.constant 0 : i32
    %c0_i32_1 = arith.constant 0 : i32
    return %c0_i32, %c0_i32_0 : i32, i32
  }
  func.func @transform_2(%arg0: i32, %arg1: i32) -> (i32, i32, i32) {
    %c0_i32 = arith.constant 0 : i32
    %c0_i32_0 = arith.constant 0 : i32
    %c0_i32_1 = arith.constant 0 : i32
    return %arg0, %c0_i32, %c0_i32_0 : i32, i32, i32
  }
  func.func @transform_3(%arg0: i32, %arg1: i32) -> (i32, i32, i32) {
    %c0_i32 = arith.constant 0 : i32
    %c0_i32_0 = arith.constant 0 : i32
    %c0_i32_1 = arith.constant 0 : i32
    return %arg0, %c0_i32, %c0_i32_0 : i32, i32, i32
  }
  func.func @transform_4(%arg0: i32, %arg1: i32) -> (i32, i32, i32) {
    %c0_i32 = arith.constant 0 : i32
    %c0_i32_0 = arith.constant 0 : i32
    %c0_i32_1 = arith.constant 0 : i32
    return %arg0, %c0_i32, %c0_i32_0 : i32, i32, i32
  }
  func.func @transform_5(%arg0: i32, %arg1: i32) -> (i32, i32, i32) {
    %c0_i32 = arith.constant 0 : i32
    %c0_i32_0 = arith.constant 0 : i32
    %c0_i32_1 = arith.constant 0 : i32
    return %arg0, %c0_i32, %c0_i32_0 : i32, i32, i32
  }
  func.func @transform_6(%arg0: i32, %arg1: i32) -> (i32, i32) {
    %c0_i32 = arith.constant 0 : i32
    %c0_i32_0 = arith.constant 0 : i32
    return %arg1, %c0_i32 : i32, i32
  }
}

</mosaic_0001>

<llo_original>
// kernel: tpu_custom_call.1
$region0: #{tpu_custom_call.1}
  #allocation0 [shape = 'u32[]', space=smem, size = 0x4, offset = 0x4, fixed_abs, tag = 'smem constant byte address 0x4 - core index']
  #allocation1 [shape = 'u32[144,128]{1,0:T(1,128)}', space=vmem, size = 0x12000, scoped, tag = 'internal scratch']
  #allocation2 [shape = 'bf16[128,128]{1,0:T(16,128)(2,1)}', space=vmem, size = 0x8000, scoped, tag = 'scratch operand']
  #allocation3 [shape = 'bf16[128,128]{1,0:T(16,128)(2,1)}', space=vmem, size = 0x8000, scoped, tag = 'scratch operand']
  %s0 = inlined_call_operand.hbm [shape: bf16[128,128], index: 0, kind: input, shape index: {}]
  %s1 = inlined_call_operand.hbm [shape: bf16[128,128], index: 1, kind: input, shape index: {}]
  %s2 = inlined_call_operand.hbm [shape: bf16[3,128,128], index: 2, kind: input, shape index: {}]
  %s3 = inlined_call_operand.vmem [shape: f32[3,1,128], index: 3, kind: input, shape index: {}]
  %s4 = inlined_call_operand.hbm [shape: bf16[3,128,128], index: 4, kind: input, shape index: {}]
  %s5 = inlined_call_operand.vmem [shape: f32[3,1,128], index: 5, kind: input, shape index: {}]
  %s6 = inlined_call_operand.hbm [shape: f32[128,128], index: 6, kind: output, shape index: {}]
  %s7 = sld [smem:[#allocation0]]
  $region85: #{tpu_custom_call.1} parent=0
    _
  %s9 = ssub.s32 1, %s7
  %s10 = scalar_select 0, %s9, %s7
  $region1: #{tpu_custom_call.1} parent=0
    #allocation4 [shape = 'u8[32768]{0}', space=vmem, size = 0x8000, scoped, tag = 'input window, operand 0, single buffered']
    #allocation5 [shape = 's32[2]{0}', space=sflag, size = 0x8, scoped, tag = 'scoped memory for tpu_custom_call.1']
    #allocation6 [shape = 's32[2]{0}', space=sflag, size = 0x8, scoped, tag = 'scoped memory for tpu_custom_call.1']
    #allocation7 [shape = 'u8[32768]{0}', space=vmem, size = 0x8000, scoped, tag = 'input window, operand 1, single buffered']
    #allocation8 [shape = 's32[1]{0}', space=sflag, size = 0x4, scoped, tag = 'scoped memory for tpu_custom_call.1']
    #allocation9 [shape = 'u8[65536]{0}', space=vmem, size = 0x10000, scoped, tag = 'input window, operand 2']
    #allocation10 [shape = 'u8[65536]{0}', space=vmem, size = 0x10000, scoped, tag = 'input window, operand 4']
    #allocation11 [shape = 'u8[65536]{0}', space=vmem, size = 0x10000, scoped, tag = 'output window, operand 0, single buffered']
    %11 = vsyncpa [#allocation5], 0
    %12 = vsyncpa [#allocation8], 0
    %13 = vsyncpa [#allocation6], 0
    loop: start=0, step=1, limit=5
    $region2: #{tpu_custom_call.1} parent=1 // loop_pre_header
      _
    $region3: #{tpu_custom_call.1} parent=1 // loop_header
      %s15 = sphi 0, %s19
      %p16 = scmp.ge.s32.totalorder %s15, 5
      %s22 = sphi 0, %s34
      %s23 = sphi 0, %s30
      %s24 = sphi 0, %s22
      %s25 = sphi 0, %s23
      %s26 = sphi 0, %s24
      %s27 = sphi 0, %s25
      %s37 = sphi 0, %s39
      %s40 = sphi 0, %s37
      %s41 = sphi 0, %s40
      %s57 = sphi 0, %s41
      %s61 = sphi 0, %s61
      %s63 = sphi 0, %s61
      %s64 = sphi 0, %s63
      %s78 = sphi 0, %s64
      %s84 = sphi 0, %s86
      %s87 = sphi 0, %s84
      %s88 = sphi 0, %s87
      %s104 = sphi 0, %s88
      %s110 = sphi 0, %s112
      %s113 = sphi 0, %s110
      %s114 = sphi 0, %s113
      %s130 = sphi 0, %s114
      %s136 = sphi 0, %s138
      %s139 = sphi 0, %s136
      %s140 = sphi 0, %s139
      %s156 = sphi 0, %s140
      %s162 = sphi 0, %s164
      %s165 = sphi 0, %s162
      %s166 = sphi 0, %s165
      %s182 = sphi 0, %s166
      %s188 = sphi 0, %s190
      %s191 = sphi 0, %s188
      %s192 = sphi 0, %s191
      %s208 = sphi 0, %s192
    $region4: #{tpu_custom_call.1} parent=1 // loop_header_branch
      %18 = sbr.rel (%p16) target = $region8
    $region5: #{tpu_custom_call.1} parent=1 // loop_body
      %s20 = ssub.s32 %s15, 1
      %s21 = ssub.s32 %s15, 2
      %s28 = sadd.s32 1, %s23
      %p29 = scmp.ge.s32.totalorder %s28, 1
      %s30 = scalar_select %p29, 0, %s28
      %s31 = sadd.s32 1, %s22
      %s32 = scalar_select %p29, %s31, %s22
      %p33 = scmp.ge.s32.totalorder %s32, 3
      %s34 = scalar_select %p33, 0, %s32
      %s35 = ssub.s32 %s23, %s30
      %p36 = scmp.eq.s32.totalorder %s35, 0
      %s38 = sadd.s32 %s37, 1
      %s39 = scalar_select %p36, %s37, %s38
      %p42 = pneg %p36
      %p43 = scmp.eq.s32.totalorder %s15, 2
      %p44 = por %p42, %p43
      %p45 = scmp.ne.s32.totalorder %s37, %s40
      %p46 = scmp.eq.s32.totalorder %s15, 0
      %p47 = por %p45, %p46
      %p48 = scmp.ne.s32.totalorder %s37, %s40
      %p49 = scmp.eq.s32.totalorder %s20, 2
      %p50 = por %p48, %p49
      %p51 = scmp.ne.s32.totalorder %s40, %s41
      %p52 = scmp.eq.s32.totalorder %s20, 0
      %p53 = por %p51, %p52
      %p54 = scmp.ne.s32.totalorder %s40, %s41
      %p55 = scmp.eq.s32.totalorder %s21, 2
      %p56 = por %p54, %p55
      %p58 = scmp.ne.s32.totalorder %s41, %s57
      %p59 = scmp.eq.s32.totalorder %s21, 0
      %p60 = por %p58, %p59
      %s62 = sadd.s32 %s61, 1
      %p65 = scmp.eq.s32.totalorder %s15, 2
      %p66 = scmp.ne.s32.totalorder %s61, %s63
      %p67 = scmp.eq.s32.totalorder %s15, 0
      %p68 = por %p66, %p67
      %p69 = scmp.ne.s32.totalorder %s61, %s63
      %p70 = scmp.eq.s32.totalorder %s20, 2
      %p71 = por %p69, %p70
      %p72 = scmp.ne.s32.totalorder %s63, %s64
      %p73 = scmp.eq.s32.totalorder %s20, 0
      %p74 = por %p72, %p73
      %p75 = scmp.ne.s32.totalorder %s63, %s64
      %p76 = scmp.eq.s32.totalorder %s21, 2
      %p77 = por %p75, %p76
      %p79 = scmp.ne.s32.totalorder %s64, %s78
      %p80 = scmp.eq.s32.totalorder %s21, 0
      %p81 = por %p79, %p80
      %s82 = ssub.s32 %s22, %s34
      %p83 = scmp.eq.s32.totalorder %s82, 0
      %s85 = sadd.s32 %s84, 1
      %s86 = scalar_select %p83, %s84, %s85
      %p89 = pneg %p83
      %p90 = scmp.eq.s32.totalorder %s15, 2
      %p91 = por %p89, %p90
      %p92 = scmp.ne.s32.totalorder %s84, %s87
      %p93 = scmp.eq.s32.totalorder %s15, 0
      %p94 = por %p92, %p93
      %p95 = scmp.ne.s32.totalorder %s84, %s87
      %p96 = scmp.eq.s32.totalorder %s20, 2
      %p97 = por %p95, %p96
      %p98 = scmp.ne.s32.totalorder %s87, %s88
      %p99 = scmp.eq.s32.totalorder %s20, 0
      %p100 = por %p98, %p99
      %p101 = scmp.ne.s32.totalorder %s87, %s88
      %p102 = scmp.eq.s32.totalorder %s21, 2
      %p103 = por %p101, %p102
      %p105 = scmp.ne.s32.totalorder %s88, %s104
      %p106 = scmp.eq.s32.totalorder %s21, 0
      %p107 = por %p105, %p106
      %s108 = ssub.s32 %s22, %s34
      %p109 = scmp.eq.s32.totalorder %s108, 0
      %s111 = sadd.s32 %s110, 1
      %s112 = scalar_select %p109, %s110, %s111
      %p115 = pneg %p109
      %p116 = scmp.eq.s32.totalorder %s15, 2
      %p117 = por %p115, %p116
      %p118 = scmp.ne.s32.totalorder %s110, %s113
      %p119 = scmp.eq.s32.totalorder %s15, 0
      %p120 = por %p118, %p119
      %p121 = scmp.ne.s32.totalorder %s110, %s113
      %p122 = scmp.eq.s32.totalorder %s20, 2
      %p123 = por %p121, %p122
      %p124 = scmp.ne.s32.totalorder %s113, %s114
      %p125 = scmp.eq.s32.totalorder %s20, 0
      %p126 = por %p124, %p125
      %p127 = scmp.ne.s32.totalorder %s113, %s114
      %p128 = scmp.eq.s32.totalorder %s21, 2
      %p129 = por %p127, %p128
      %p131 = scmp.ne.s32.totalorder %s114, %s130
      %p132 = scmp.eq.s32.totalorder %s21, 0
      %p133 = por %p131, %p132
      %s134 = ssub.s32 %s22, %s34
      %p135 = scmp.eq.s32.totalorder %s134, 0
      %s137 = sadd.s32 %s136, 1
      %s138 = scalar_select %p135, %s136, %s137
      %p141 = pneg %p135
      %p142 = scmp.eq.s32.totalorder %s15, 2
      %p143 = por %p141, %p142
      %p144 = scmp.ne.s32.totalorder %s136, %s139
      %p145 = scmp.eq.s32.totalorder %s15, 0
      %p146 = por %p144, %p145
      %p147 = scmp.ne.s32.totalorder %s136, %s139
      %p148 = scmp.eq.s32.totalorder %s20, 2
      %p149 = por %p147, %p148
      %p150 = scmp.ne.s32.totalorder %s139, %s140
      %p151 = scmp.eq.s32.totalorder %s20, 0
      %p152 = por %p150, %p151
      %p153 = scmp.ne.s32.totalorder %s139, %s140
      %p154 = scmp.eq.s32.totalorder %s21, 2
      %p155 = por %p153, %p154
      %p157 = scmp.ne.s32.totalorder %s140, %s156
      %p158 = scmp.eq.s32.totalorder %s21, 0
      %p159 = por %p157, %p158
      %s160 = ssub.s32 %s22, %s34
      %p161 = scmp.eq.s32.totalorder %s160, 0
      %s163 = sadd.s32 %s162, 1
      %s164 = scalar_select %p161, %s162, %s163
      %p167 = pneg %p161
      %p168 = scmp.eq.s32.totalorder %s15, 2
      %p169 = por %p167, %p168
      %p170 = scmp.ne.s32.totalorder %s162, %s165
      %p171 = scmp.eq.s32.totalorder %s15, 0
      %p172 = por %p170, %p171
      %p173 = scmp.ne.s32.totalorder %s162, %s165
      %p174 = scmp.eq.s32.totalorder %s20, 2
      %p175 = por %p173, %p174
      %p176 = scmp.ne.s32.totalorder %s165, %s166
      %p177 = scmp.eq.s32.totalorder %s20, 0
      %p178 = por %p176, %p177
      %p179 = scmp.ne.s32.totalorder %s165, %s166
      %p180 = scmp.eq.s32.totalorder %s21, 2
      %p181 = por %p179, %p180
      %p183 = scmp.ne.s32.totalorder %s166, %s182
      %p184 = scmp.eq.s32.totalorder %s21, 0
      %p185 = por %p183, %p184
      %s186 = ssub.s32 %s23, %s30
      %p187 = scmp.eq.s32.totalorder %s186, 0
      %s189 = sadd.s32 %s188, 1
      %s190 = scalar_select %p187, %s188, %s189
      %p193 = pneg %p187
      %p194 = scmp.eq.s32.totalorder %s15, 2
      %p195 = por %p193, %p194
      %p196 = scmp.ne.s32.totalorder %s188, %s191
      %p197 = scmp.eq.s32.totalorder %s15, 0
      %p198 = por %p196, %p197
      %p199 = scmp.ne.s32.totalorder %s188, %s191
      %p200 = scmp.eq.s32.totalorder %s20, 2
      %p201 = por %p199, %p200
      %p202 = scmp.ne.s32.totalorder %s191, %s192
      %p203 = scmp.eq.s32.totalorder %s20, 0
      %p204 = por %p202, %p203
      %p205 = scmp.ne.s32.totalorder %s191, %s192
      %p206 = scmp.eq.s32.totalorder %s21, 2
      %p207 = por %p205, %p206
      %p209 = scmp.ne.s32.totalorder %s192, %s208
      %p210 = scmp.eq.s32.totalorder %s21, 0
      %p211 = por %p209, %p210
      %p212 = scmp.le.s32.totalorder 1, %s15
      %p213 = scmp.lt.s32.totalorder %s15, 4
      %p214 = pnand %p212, %p213
      %p215 = pneg %p214
      // Predicated region
      $region9: #{tpu_custom_call.1} parent=5 // pred_check
        _
      $region10: #{tpu_custom_call.1} parent=5 // pred_check_branch
        %217 = sbr.rel (%p214) target = $region12
      $region11: #{tpu_custom_call.1} parent=5 // pred_region
        %s218 = ssub.s32 %s15, 1
        // Predicated region
        $region13: #{tpu_custom_call.1} parent=11 // pred_check
          %p219 = pneg %p53
        $region14: #{tpu_custom_call.1} parent=11 // pred_check_branch
          %221 = sbr.rel (%p219) target = $region16
        $region15: #{tpu_custom_call.1} parent=11 // pred_region
          %s222 = smul.u32 16, %s25
          %s224 = ssub.s32 1024, 1024
          %225 = vsyncadd [#allocation5], %s224
          %s226 = smul.addr %s222, 64
          %s227 = scalar_lea.hbm %s0, %s226
          %s228 = sshll.u32 [#allocation4], 4
          %s229 = int_to_ptr.vmem [resolvable:$true] %s228
          %234 = dma.hbm_to_vmem [thread:$0]  %s227, 1024, %s229, [#allocation5], 64, 64, 4
        $region16: #{tpu_custom_call.1} parent=11 // pred_fallthru
          _
        // Predicated region
        $region17: #{tpu_custom_call.1} parent=11 // pred_check
          %p235 = pneg %p74
        $region18: #{tpu_custom_call.1} parent=11 // pred_check_branch
          %237 = sbr.rel (%p235) target = $region20
        $region19: #{tpu_custom_call.1} parent=11 // pred_region
          %s239 = ssub.s32 1024, 1024
          %240 = vsyncadd [#allocation8], %s239
          %s241 = sshll.u32 [#allocation7], 4
          %s242 = int_to_ptr.vmem [resolvable:$true] %s241
          %247 = dma.hbm_to_vmem [thread:$0]  %s1, 1024, %s242, [#allocation8], 64, 64, 4
        $region20: #{tpu_custom_call.1} parent=11 // pred_fallthru
          _
      $region12: #{tpu_custom_call.1} parent=5 // pred_fallthru
        _
      %p248 = scmp.lt.s32.totalorder %s15, 3
      // Predicated region
      $region21: #{tpu_custom_call.1} parent=5 // pred_check
        %p249 = pneg %p248
      $region22: #{tpu_custom_call.1} parent=5 // pred_check_branch
        %251 = sbr.rel (%p249) target = $region24
      $region23: #{tpu_custom_call.1} parent=5 // pred_region
        // Predicated region
        $region25: #{tpu_custom_call.1} parent=23 // pred_check
          %p252 = pneg %p94
        $region26: #{tpu_custom_call.1} parent=23 // pred_check_branch
          %254 = sbr.rel (%p252) target = $region28
        $region27: #{tpu_custom_call.1} parent=23 // pred_region
          %s255 = sand.u32 %s15, 1
          %s256 = scalar_lea.sflag [#allocation5], %s255
          %s257 = sand.u32 %s84, 1
          %s258 = smul.addr %s257, 64
          %s259 = scalar_lea.vmem [#allocation9], %s258
          %s261 = ssub.s32 1024, 1024
          %262 = vsyncadd %s256, %s261
          %s263 = smul.addr %s22, 16
          %s264 = smul.addr %s263, 64
          %s265 = scalar_lea.hbm %s2, %s264
          %s266 = sshll.u32 %s259, 4
          %s267 = int_to_ptr.vmem [resolvable:$true] %s266
          %272 = dma.hbm_to_vmem [thread:$0]  %s265, 1024, %s267, %s256, 64, 64, 4
        $region28: #{tpu_custom_call.1} parent=23 // pred_fallthru
          _
        // Predicated region
        $region29: #{tpu_custom_call.1} parent=23 // pred_check
          %p273 = pneg %p120
        $region30: #{tpu_custom_call.1} parent=23 // pred_check_branch
          %275 = sbr.rel (%p273) target = $region32
        $region31: #{tpu_custom_call.1} parent=23 // pred_region
          %p276 = scmp.lt.s32.totalorder %s22, 2
          %s277 = scalar_select %p276, %s22, 2
          %s278 = scalar_lea.vmem %s3, %s277
        $region32: #{tpu_custom_call.1} parent=23 // pred_fallthru
          _
        // Predicated region
        $region33: #{tpu_custom_call.1} parent=23 // pred_check
          %p279 = pneg %p146
        $region34: #{tpu_custom_call.1} parent=23 // pred_check_branch
          %281 = sbr.rel (%p279) target = $region36
        $region35: #{tpu_custom_call.1} parent=23 // pred_region
          %s282 = sand.u32 %s15, 1
          %s283 = scalar_lea.sflag [#allocation5], %s282
          %s284 = sand.u32 %s136, 1
          %s285 = smul.addr %s284, 64
          %s286 = scalar_lea.vmem [#allocation10], %s285
          %s288 = ssub.s32 1024, 1024
          %289 = vsyncadd %s283, %s288
          %s290 = smul.addr %s22, 16
          %s291 = smul.addr %s290, 64
          %s292 = scalar_lea.hbm %s4, %s291
          %s293 = sshll.u32 %s286, 4
          %s294 = int_to_ptr.vmem [resolvable:$true] %s293
          %299 = dma.hbm_to_vmem [thread:$0]  %s292, 1024, %s294, %s283, 64, 64, 4
        $region36: #{tpu_custom_call.1} parent=23 // pred_fallthru
          _
        // Predicated region
        $region37: #{tpu_custom_call.1} parent=23 // pred_check
          %p300 = pneg %p172
        $region38: #{tpu_custom_call.1} parent=23 // pred_check_branch
          %302 = sbr.rel (%p300) target = $region40
        $region39: #{tpu_custom_call.1} parent=23 // pred_region
          %p303 = scmp.lt.s32.totalorder %s22, 2
          %s304 = scalar_select %p303, %s22, 2
          %s305 = scalar_lea.vmem %s5, %s304
        $region40: #{tpu_custom_call.1} parent=23 // pred_fallthru
          _
      $region24: #{tpu_custom_call.1} parent=5 // pred_fallthru
        _
      %p306 = scmp.le.s32.totalorder 1, %s15
      %p307 = scmp.lt.s32.totalorder %s15, 4
      %p308 = pnand %p306, %p307
      %p309 = pneg %p308
      // Predicated region
      $region41: #{tpu_custom_call.1} parent=5 // pred_check
        _
      $region42: #{tpu_custom_call.1} parent=5 // pred_check_branch
        %311 = sbr.rel (%p308) target = $region44
      $region43: #{tpu_custom_call.1} parent=5 // pred_region
        %s312 = ssub.s32 %s15, 1
        // Predicated region
        $region45: #{tpu_custom_call.1} parent=43 // pred_check
          %p313 = pneg %p53
        $region46: #{tpu_custom_call.1} parent=43 // pred_check_branch
          %315 = sbr.rel (%p313) target = $region48
        $region47: #{tpu_custom_call.1} parent=43 // pred_region
          %316 = dma.done [#allocation5], 1024
        $region48: #{tpu_custom_call.1} parent=43 // pred_fallthru
          _
        // Predicated region
        $region49: #{tpu_custom_call.1} parent=43 // pred_check
          %p317 = pneg %p74
        $region50: #{tpu_custom_call.1} parent=43 // pred_check_branch
          %319 = sbr.rel (%p317) target = $region52
        $region51: #{tpu_custom_call.1} parent=43 // pred_region
          %320 = dma.done [#allocation8], 1024
        $region52: #{tpu_custom_call.1} parent=43 // pred_fallthru
          _
        %s321 = sand.u32 %s20, 1
        %s322 = scalar_lea.sflag [#allocation5], %s321
        %s323 = sand.u32 %s87, 1
        %s324 = smul.addr %s323, 64
        %s325 = scalar_lea.vmem [#allocation9], %s324
        // Predicated region
        $region53: #{tpu_custom_call.1} parent=43 // pred_check
          %p326 = pneg %p100
        $region54: #{tpu_custom_call.1} parent=43 // pred_check_branch
          %328 = sbr.rel (%p326) target = $region56
        $region55: #{tpu_custom_call.1} parent=43 // pred_region
          %329 = dma.done %s322, 1024
        $region56: #{tpu_custom_call.1} parent=43 // pred_fallthru
          _
        %s330 = sand.u32 %s20, 1
        %s331 = scalar_lea.sflag [#allocation5], %s330
        %s332 = sand.u32 %s139, 1
        %s333 = smul.addr %s332, 64
        %s334 = scalar_lea.vmem [#allocation10], %s333
        // Predicated region
        $region57: #{tpu_custom_call.1} parent=43 // pred_check
          %p335 = pneg %p152
        $region58: #{tpu_custom_call.1} parent=43 // pred_check_branch
          %337 = sbr.rel (%p335) target = $region60
        $region59: #{tpu_custom_call.1} parent=43 // pred_region
          %338 = dma.done %s331, 1024
        $region60: #{tpu_custom_call.1} parent=43 // pred_fallthru
          _
        %p339 = pneg %p53
        %p340 = pneg %p50
        %p341 = pneg %p74
        %p342 = pneg %p71
        %s343 = sand.u32 %s20, 1
        %s344 = scalar_lea.sflag [#allocation5], %s343
        %s345 = sand.u32 %s87, 1
        %s346 = smul.addr %s345, 64
        %s347 = scalar_lea.vmem [#allocation9], %s346
        %p348 = pneg %p100
        %p349 = pneg %p97
        %p350 = scmp.lt.s32.totalorder %s24, 2
        %s351 = scalar_select %p350, %s24, 2
        %s352 = scalar_lea.vmem %s3, %s351
        %p353 = pneg %p126
        %p354 = pneg %p123
        %s355 = sand.u32 %s20, 1
        %s356 = scalar_lea.sflag [#allocation5], %s355
        %s357 = sand.u32 %s139, 1
        %s358 = smul.addr %s357, 64
        %s359 = scalar_lea.vmem [#allocation10], %s358
        %p360 = pneg %p152
        %p361 = pneg %p149
        %p362 = scmp.lt.s32.totalorder %s24, 2
        %s363 = scalar_select %p362, %s24, 2
        %s364 = scalar_lea.vmem %s5, %s363
        %p365 = pneg %p178
        %p366 = pneg %p175
        %p367 = pneg %p204
        %p368 = pneg %p201
        %s369 = smul.u32 16, %s25
        %p370 = scmp.lt.s32.totalorder %s24, 2
        %s371 = scalar_select %p370, %s24, 2
        %s372 = scalar_lea.vmem %s3, %s371
        %p373 = scmp.lt.s32.totalorder %s24, 2
        %s374 = scalar_select %p373, %s24, 2
        %s375 = scalar_lea.vmem %s5, %s374
        %s376 = smul.u32 16, %s25
        %p378 = scmp.eq.s32.totalorder %s24, 0
        %p379 = scmp.eq.s32.totalorder %s25, 0
        %p380 = pnand %p378, %p379
        %p381 = pneg %p380
        // Predicated region
        $region61: #{tpu_custom_call.1} parent=43 // pred_check
          _
        $region62: #{tpu_custom_call.1} parent=43 // pred_check_branch
          %383 = sbr.rel (%p380) target = $region64
        $region63: #{tpu_custom_call.1} parent=43 // pred_region
          %v384 = vld [vmem:[#allocation7] sm:$0xf]
          %v385 = vld [vmem:[#allocation7 + $0x4] sm:$0xf]
          %v386 = vld [vmem:[#allocation7 + $0x8] sm:$0xf]
          %v387 = vld [vmem:[#allocation7 + $0xc] sm:$0xf]
          %v388 = vld [vmem:[#allocation7 + $0x10] sm:$0xf]
          %v389 = vld [vmem:[#allocation7 + $0x14] sm:$0xf]
          %v390 = vld [vmem:[#allocation7 + $0x18] sm:$0xf]
          %v391 = vld [vmem:[#allocation7 + $0x1c] sm:$0xf]
          %v392 = vld [vmem:[#allocation7 + $0x20] sm:$0xf]
          %v393 = vld [vmem:[#allocation7 + $0x24] sm:$0xf]
          %v394 = vld [vmem:[#allocation7 + $0x28] sm:$0xf]
          %v395 = vld [vmem:[#allocation7 + $0x2c] sm:$0xf]
          %v396 = vld [vmem:[#allocation7 + $0x30] sm:$0xf]
          %v397 = vld [vmem:[#allocation7 + $0x34] sm:$0xf]
          %v398 = vld [vmem:[#allocation7 + $0x38] sm:$0xf]
          %v399 = vld [vmem:[#allocation7 + $0x3c] sm:$0xf]
          %v416 = vunpack.c.l.b16 %v384
          %v417 = vunpack.c.l.b16 %v385
          %v418 = vunpack.c.l.b16 %v386
          %v419 = vunpack.c.l.b16 %v387
          %v420 = vunpack.c.l.b16 %v388
          %v421 = vunpack.c.l.b16 %v389
          %v422 = vunpack.c.l.b16 %v390
          %v423 = vunpack.c.l.b16 %v391
          %v424 = vunpack.c.l.b16 %v392
          %v425 = vunpack.c.l.b16 %v393
          %v426 = vunpack.c.l.b16 %v394
          %v427 = vunpack.c.l.b16 %v395
          %v428 = vunpack.c.l.b16 %v396
          %v429 = vunpack.c.l.b16 %v397
          %v430 = vunpack.c.l.b16 %v398
          %v431 = vunpack.c.l.b16 %v399
          %v432 = vpack.c.b16 %v417, %v416
          %v433 = vpack.c.b16 %v419, %v418
          %v434 = vpack.c.b16 %v421, %v420
          %v435 = vpack.c.b16 %v423, %v422
          %v436 = vpack.c.b16 %v425, %v424
          %v437 = vpack.c.b16 %v427, %v426
          %v438 = vpack.c.b16 %v429, %v428
          %v439 = vpack.c.b16 %v431, %v430
          %448 = vst [vmem:[#allocation2] sm:$0xff] %v432
          %449 = vst [vmem:[#allocation2 + $0x8] sm:$0xff] %v433
          %450 = vst [vmem:[#allocation2 + $0x10] sm:$0xff] %v434
          %451 = vst [vmem:[#allocation2 + $0x18] sm:$0xff] %v435
          %452 = vst [vmem:[#allocation2 + $0x20] sm:$0xff] %v436
          %453 = vst [vmem:[#allocation2 + $0x28] sm:$0xff] %v437
          %454 = vst [vmem:[#allocation2 + $0x30] sm:$0xff] %v438
          %455 = vst [vmem:[#allocation2 + $0x38] sm:$0xff] %v439
        $region64: #{tpu_custom_call.1} parent=43 // pred_fallthru
          _
        %p456 = scmp.lt.s32.totalorder %s24, 0
        %s457 = ssub.s32 0, %s24
        %s458 = scalar_select %p456, %s457, %s24
        %s459 = sand.u32 %s458, 1
        %s460 = ssub.s32 0, %s459
        %s461 = scalar_select %p456, %s460, %s459
        %p462 = scmp.ne.s32.totalorder %s461, 0
        %p463 = scmp.lt.s32.totalorder %s461, 0
        %p464 = pnand %p463, %p462
        %p465 = pneg %p464
        %s466 = sadd.s32 %s461, 2
        %s467 = scalar_select %p465, %s466, %s461
        %p468 = scmp.eq.s32.totalorder %s467, 0
        %v469 = vld [vmem:[#allocation2] sm:$0xff]
        %v470 = vld [vmem:[#allocation2 + $0x8] sm:$0xff]
        %v471 = vld [vmem:[#allocation2 + $0x10] sm:$0xff]
        %v472 = vld [vmem:[#allocation2 + $0x18] sm:$0xff]
        %v473 = vld [vmem:[#allocation2 + $0x20] sm:$0xff]
        %v474 = vld [vmem:[#allocation2 + $0x28] sm:$0xff]
        %v475 = vld [vmem:[#allocation2 + $0x30] sm:$0xff]
        %v476 = vld [vmem:[#allocation2 + $0x38] sm:$0xff]
        %v477 = vld [vmem:[#allocation3] sm:$0xff]
        %v478 = vld [vmem:[#allocation3 + $0x8] sm:$0xff]
        %v479 = vld [vmem:[#allocation3 + $0x10] sm:$0xff]
        %v480 = vld [vmem:[#allocation3 + $0x18] sm:$0xff]
        %v481 = vld [vmem:[#allocation3 + $0x20] sm:$0xff]
        %v482 = vld [vmem:[#allocation3 + $0x28] sm:$0xff]
        %v483 = vld [vmem:[#allocation3 + $0x30] sm:$0xff]
        %v484 = vld [vmem:[#allocation3 + $0x38] sm:$0xff]
        %s485 = scalar_select %p468, 1, 0
        %v486 = vstv %s485
        %vm487 = vcmp.eq.s32.totalorder %v486, 1
        %v488 = vsel %vm487, %v469, %v477
        %v489 = vsel %vm487, %v470, %v478
        %v490 = vsel %vm487, %v471, %v479
        %v491 = vsel %vm487, %v472, %v480
        %v492 = vsel %vm487, %v473, %v481
        %v493 = vsel %vm487, %v474, %v482
        %v494 = vsel %vm487, %v475, %v483
        %v495 = vsel %vm487, %v476, %v484
        %v496 = vld [vmem:[#allocation4] sm:$0xf]
        %v497 = vld [vmem:[#allocation4 + $0x4] sm:$0xf]
        %v498 = vld [vmem:[#allocation4 + $0x8] sm:$0xf]
        %v499 = vld [vmem:[#allocation4 + $0xc] sm:$0xf]
        %v500 = vld [vmem:[#allocation4 + $0x10] sm:$0xf]
        %v501 = vld [vmem:[#allocation4 + $0x14] sm:$0xf]
        %v502 = vld [vmem:[#allocation4 + $0x18] sm:$0xf]
        %v503 = vld [vmem:[#allocation4 + $0x1c] sm:$0xf]
        %v504 = vld [vmem:[#allocation4 + $0x20] sm:$0xf]
        %v505 = vld [vmem:[#allocation4 + $0x24] sm:$0xf]
        %v506 = vld [vmem:[#allocation4 + $0x28] sm:$0xf]
        %v507 = vld [vmem:[#allocation4 + $0x2c] sm:$0xf]
        %v508 = vld [vmem:[#allocation4 + $0x30] sm:$0xf]
        %v509 = vld [vmem:[#allocation4 + $0x34] sm:$0xf]
        %v510 = vld [vmem:[#allocation4 + $0x38] sm:$0xf]
        %v511 = vld [vmem:[#allocation4 + $0x3c] sm:$0xf]
        %v528 = vunpack.c.l.b16 %v496
        %v529 = vunpack.c.l.b16 %v497
        %v530 = vunpack.c.l.b16 %v498
        %v531 = vunpack.c.l.b16 %v499
        %v532 = vunpack.c.l.b16 %v500
        %v533 = vunpack.c.l.b16 %v501
        %v534 = vunpack.c.l.b16 %v502
        %v535 = vunpack.c.l.b16 %v503
        %v536 = vunpack.c.l.b16 %v504
        %v537 = vunpack.c.l.b16 %v505
        %v538 = vunpack.c.l.b16 %v506
        %v539 = vunpack.c.l.b16 %v507
        %v540 = vunpack.c.l.b16 %v508
        %v541 = vunpack.c.l.b16 %v509
        %v542 = vunpack.c.l.b16 %v510
        %v543 = vunpack.c.l.b16 %v511
        %v544 = vpack.c.b16 %v529, %v528
        %v545 = vpack.c.b16 %v531, %v530
        %v546 = vpack.c.b16 %v533, %v532
        %v547 = vpack.c.b16 %v535, %v534
        %v548 = vpack.c.b16 %v537, %v536
        %v549 = vpack.c.b16 %v539, %v538
        %v550 = vpack.c.b16 %v541, %v540
        %v551 = vpack.c.b16 %v543, %v542
        %560 = vmatprep.subr.bf16.mxu0 0
        %561 = vmatpush1.bf16.msra.mxu0 %v488
        %562 = vmatprep.subr.bf16.mxu0 0
        %563 = vmatpush1.bf16.msra.mxu0 %v489
        %564 = vmatprep.subr.bf16.mxu0 0
        %565 = vmatpush1.bf16.msra.mxu0 %v490
        %566 = vmatprep.subr.bf16.mxu0 0
        %567 = vmatpush1.bf16.msra.mxu0 %v491
        %568 = vmatprep.subr.bf16.mxu0 0
        %569 = vmatpush1.bf16.msra.mxu0 %v492
        %570 = vmatprep.subr.bf16.mxu0 0
        %571 = vmatpush1.bf16.msra.mxu0 %v493
        %572 = vmatprep.subr.bf16.mxu0 0
        %573 = vmatpush1.bf16.msra.mxu0 %v494
        %574 = vmatprep.subr.bf16.mxu0 0
        %575 = vmatpush1.bf16.msra.mxu0 %v495
        %576 = vmatprep.subr.bf16.mxu0 0
        %577 = vmatpush1.bf16.msra.mxu0 0
        %578 = vmatprep.subr.bf16.mxu0 0
        %579 = vmatpush1.bf16.msra.mxu0 0
        %580 = vmatprep.subr.bf16.mxu0 0
        %581 = vmatpush1.bf16.msra.mxu0 0
        %582 = vmatprep.subr.bf16.mxu0 0
        %583 = vmatpush1.bf16.msra.mxu0 0
        %584 = vmatprep.subr.bf16.mxu0 0
        %585 = vmatpush1.bf16.msra.mxu0 0
        %586 = vmatprep.subr.bf16.mxu0 0
        %587 = vmatpush1.bf16.msra.mxu0 0
        %588 = vmatprep.subr.bf16.mxu0 0
        %589 = vmatpush1.bf16.msra.mxu0 0
        %590 = vmatprep.subr.bf16.mxu0 0
        %591 = vmatpush1.bf16.msra.mxu0 0
        %592 = vmatprep.mubr.bf16.mxu0 0
        %593 = vmatmul.mubr.bf16.gmra.mrb[0].mxu0 %v544
        %v594 = vpop.f32.mrb[0].mxu0
        %v595 = vadd.f32 0.0, %v594
        %v596 = vpop.f32.mrb[0].mxu0
        %v597 = vpop.f32.mrb[0].mxu0
        %v598 = vadd.f32 0.0, %v597
        %v599 = vpop.f32.mrb[0].mxu0
        %600 = vmatprep.mubr.bf16.mxu0 0
        %601 = vmatmul.mubr.bf16.gmra.mrb[0].mxu0 %v545
        %v602 = vpop.f32.mrb[0].mxu0
        %v603 = vadd.f32 0.0, %v602
        %v604 = vpop.f32.mrb[0].mxu0
        %v605 = vpop.f32.mrb[0].mxu0
        %v606 = vadd.f32 0.0, %v605
        %v607 = vpop.f32.mrb[0].mxu0
        %608 = vmatprep.mubr.bf16.mxu0 0
        %609 = vmatmul.mubr.bf16.gmra.mrb[0].mxu0 %v546
        %v610 = vpop.f32.mrb[0].mxu0
        %v611 = vadd.f32 0.0, %v610
        %v612 = vpop.f32.mrb[0].mxu0
        %v613 = vpop.f32.mrb[0].mxu0
        %v614 = vadd.f32 0.0, %v613
        %v615 = vpop.f32.mrb[0].mxu0
        %616 = vmatprep.mubr.bf16.mxu0 0
        %617 = vmatmul.mubr.bf16.gmra.mrb[0].mxu0 %v547
        %v618 = vpop.f32.mrb[0].mxu0
        %v619 = vadd.f32 0.0, %v618
        %v620 = vpop.f32.mrb[0].mxu0
        %v621 = vpop.f32.mrb[0].mxu0
        %v622 = vadd.f32 0.0, %v621
        %v623 = vpop.f32.mrb[0].mxu0
        %624 = vmatprep.mubr.bf16.mxu0 0
        %625 = vmatmul.mubr.bf16.gmra.mrb[0].mxu0 %v548
        %v626 = vpop.f32.mrb[0].mxu0
        %v627 = vadd.f32 0.0, %v626
        %v628 = vpop.f32.mrb[0].mxu0
        %v629 = vpop.f32.mrb[0].mxu0
        %v630 = vadd.f32 0.0, %v629
        %v631 = vpop.f32.mrb[0].mxu0
        %632 = vmatprep.mubr.bf16.mxu0 0
        %633 = vmatmul.mubr.bf16.gmra.mrb[0].mxu0 %v549
        %v634 = vpop.f32.mrb[0].mxu0
        %v635 = vadd.f32 0.0, %v634
        %v636 = vpop.f32.mrb[0].mxu0
        %v637 = vpop.f32.mrb[0].mxu0
        %v638 = vadd.f32 0.0, %v637
        %v639 = vpop.f32.mrb[0].mxu0
        %640 = vmatprep.mubr.bf16.mxu0 0
        %641 = vmatmul.mubr.bf16.gmra.mrb[0].mxu0 %v550
        %v642 = vpop.f32.mrb[0].mxu0
        %v643 = vadd.f32 0.0, %v642
        %v644 = vpop.f32.mrb[0].mxu0
        %v645 = vpop.f32.mrb[0].mxu0
        %v646 = vadd.f32 0.0, %v645
        %v647 = vpop.f32.mrb[0].mxu0
        %648 = vmatprep.mubr.bf16.mxu0 0
        %649 = vmatmul.mubr.bf16.gmra.mrb[0].mxu0 %v551
        %v650 = vpop.f32.mrb[0].mxu0
        %v651 = vadd.f32 0.0, %v650
        %v652 = vpop.f32.mrb[0].mxu0
        %v653 = vpop.f32.mrb[0].mxu0
        %v654 = vadd.f32 0.0, %v653
        %v655 = vpop.f32.mrb[0].mxu0
        %656 = vdwg.mxu0
        %v657 = vpack.c.bf16 %v598, %v595
        %v658 = vpack.c.bf16 %v606, %v603
        %v659 = vpack.c.bf16 %v614, %v611
        %v660 = vpack.c.bf16 %v622, %v619
        %v661 = vpack.c.bf16 %v630, %v627
        %v662 = vpack.c.bf16 %v638, %v635
        %v663 = vpack.c.bf16 %v646, %v643
        %v664 = vpack.c.bf16 %v654, %v651
        %v665 = vld [vmem:[%s325] sm:$0xf]
        %v666 = vld [vmem:[%s325 + $0x4] sm:$0xf]
        %v667 = vld [vmem:[%s325 + $0x8] sm:$0xf]
        %v668 = vld [vmem:[%s325 + $0xc] sm:$0xf]
        %v669 = vld [vmem:[%s325 + $0x10] sm:$0xf]
        %v670 = vld [vmem:[%s325 + $0x14] sm:$0xf]
        %v671 = vld [vmem:[%s325 + $0x18] sm:$0xf]
        %v672 = vld [vmem:[%s325 + $0x1c] sm:$0xf]
        %v673 = vld [vmem:[%s325 + $0x20] sm:$0xf]
        %v674 = vld [vmem:[%s325 + $0x24] sm:$0xf]
        %v675 = vld [vmem:[%s325 + $0x28] sm:$0xf]
        %v676 = vld [vmem:[%s325 + $0x2c] sm:$0xf]
        %v677 = vld [vmem:[%s325 + $0x30] sm:$0xf]
        %v678 = vld [vmem:[%s325 + $0x34] sm:$0xf]
        %v679 = vld [vmem:[%s325 + $0x38] sm:$0xf]
        %v680 = vld [vmem:[%s325 + $0x3c] sm:$0xf]
        %v681 = vld [vmem:[%s372] sm:$0x1]
        %v683 = vlaneseq
        %v684 = vshrl.u32 %v683, 7
        %v685 = vsub.s32 0, %v684
        %v686 = vrot.slane %v681, %v685
        %v704 = vunpack.c.l.b16 %v665
        %v705 = vunpack.c.l.b16 %v666
        %v706 = vunpack.c.l.b16 %v667
        %v707 = vunpack.c.l.b16 %v668
        %v708 = vunpack.c.l.b16 %v669
        %v709 = vunpack.c.l.b16 %v670
        %v710 = vunpack.c.l.b16 %v671
        %v711 = vunpack.c.l.b16 %v672
        %v712 = vunpack.c.l.b16 %v673
        %v713 = vunpack.c.l.b16 %v674
        %v714 = vunpack.c.l.b16 %v675
        %v715 = vunpack.c.l.b16 %v676
        %v716 = vunpack.c.l.b16 %v677
        %v717 = vunpack.c.l.b16 %v678
        %v718 = vunpack.c.l.b16 %v679
        %v719 = vunpack.c.l.b16 %v680
        %v720 = vpack.c.b16 %v705, %v704
        %v721 = vpack.c.b16 %v707, %v706
        %v722 = vpack.c.b16 %v709, %v708
        %v723 = vpack.c.b16 %v711, %v710
        %v724 = vpack.c.b16 %v713, %v712
        %v725 = vpack.c.b16 %v715, %v714
        %v726 = vpack.c.b16 %v717, %v716
        %v727 = vpack.c.b16 %v719, %v718
        %736 = vmatprep.subr.bf16.mxu0 0
        %737 = vmatpush1.bf16.msra.mxu0 %v720
        %738 = vmatprep.subr.bf16.mxu0 0
        %739 = vmatpush1.bf16.msra.mxu0 %v721
        %740 = vmatprep.subr.bf16.mxu0 0
        %741 = vmatpush1.bf16.msra.mxu0 %v722
        %742 = vmatprep.subr.bf16.mxu0 0
        %743 = vmatpush1.bf16.msra.mxu0 %v723
        %744 = vmatprep.subr.bf16.mxu0 0
        %745 = vmatpush1.bf16.msra.mxu0 %v724
        %746 = vmatprep.subr.bf16.mxu0 0
        %747 = vmatpush1.bf16.msra.mxu0 %v725
        %748 = vmatprep.subr.bf16.mxu0 0
        %749 = vmatpush1.bf16.msra.mxu0 %v726
        %750 = vmatprep.subr.bf16.mxu0 0
        %751 = vmatpush1.bf16.msra.mxu0 %v727
        %752 = vmatprep.subr.bf16.mxu0 0
        %753 = vmatpush1.bf16.msra.mxu0 0
        %754 = vmatprep.subr.bf16.mxu0 0
        %755 = vmatpush1.bf16.msra.mxu0 0
        %756 = vmatprep.subr.bf16.mxu0 0
        %757 = vmatpush1.bf16.msra.mxu0 0
        %758 = vmatprep.subr.bf16.mxu0 0
        %759 = vmatpush1.bf16.msra.mxu0 0
        %760 = vmatprep.subr.bf16.mxu0 0
        %761 = vmatpush1.bf16.msra.mxu0 0
        %762 = vmatprep.subr.bf16.mxu0 0
        %763 = vmatpush1.bf16.msra.mxu0 0
        %764 = vmatprep.subr.bf16.mxu0 0
        %765 = vmatpush1.bf16.msra.mxu0 0
        %766 = vmatprep.subr.bf16.mxu0 0
        %767 = vmatpush1.bf16.msra.mxu0 0
        %768 = vmatprep.mubr.bf16.mxu0 0
        %769 = vmatmul.mubr.bf16.gmra.mrb[0].mxu0 %v657
        %v770 = vpop.f32.mrb[0].mxu0
        %v771 = vadd.f32 %v686, %v770
        %v772 = vpop.f32.mrb[0].mxu0
        %v773 = vpop.f32.mrb[0].mxu0
        %v774 = vadd.f32 %v686, %v773
        %v775 = vpop.f32.mrb[0].mxu0
        %776 = vmatprep.mubr.bf16.mxu0 0
        %777 = vmatmul.mubr.bf16.gmra.mrb[0].mxu0 %v658
        %v778 = vpop.f32.mrb[0].mxu0
        %v779 = vadd.f32 %v686, %v778
        %v780 = vpop.f32.mrb[0].mxu0
        %v781 = vpop.f32.mrb[0].mxu0
        %v782 = vadd.f32 %v686, %v781
        %v783 = vpop.f32.mrb[0].mxu0
        %784 = vmatprep.mubr.bf16.mxu0 0
        %785 = vmatmul.mubr.bf16.gmra.mrb[0].mxu0 %v659
        %v786 = vpop.f32.mrb[0].mxu0
        %v787 = vadd.f32 %v686, %v786
        %v788 = vpop.f32.mrb[0].mxu0
        %v789 = vpop.f32.mrb[0].mxu0
        %v790 = vadd.f32 %v686, %v789
        %v791 = vpop.f32.mrb[0].mxu0
        %792 = vmatprep.mubr.bf16.mxu0 0
        %793 = vmatmul.mubr.bf16.gmra.mrb[0].mxu0 %v660
        %v794 = vpop.f32.mrb[0].mxu0
        %v795 = vadd.f32 %v686, %v794
        %v796 = vpop.f32.mrb[0].mxu0
        %v797 = vpop.f32.mrb[0].mxu0
        %v798 = vadd.f32 %v686, %v797
        %v799 = vpop.f32.mrb[0].mxu0
        %800 = vmatprep.mubr.bf16.mxu0 0
        %801 = vmatmul.mubr.bf16.gmra.mrb[0].mxu0 %v661
        %v802 = vpop.f32.mrb[0].mxu0
        %v803 = vadd.f32 %v686, %v802
        %v804 = vpop.f32.mrb[0].mxu0
        %v805 = vpop.f32.mrb[0].mxu0
        %v806 = vadd.f32 %v686, %v805
        %v807 = vpop.f32.mrb[0].mxu0
        %808 = vmatprep.mubr.bf16.mxu0 0
        %809 = vmatmul.mubr.bf16.gmra.mrb[0].mxu0 %v662
        %v810 = vpop.f32.mrb[0].mxu0
        %v811 = vadd.f32 %v686, %v810
        %v812 = vpop.f32.mrb[0].mxu0
        %v813 = vpop.f32.mrb[0].mxu0
        %v814 = vadd.f32 %v686, %v813
        %v815 = vpop.f32.mrb[0].mxu0
        %816 = vmatprep.mubr.bf16.mxu0 0
        %817 = vmatmul.mubr.bf16.gmra.mrb[0].mxu0 %v663
        %v818 = vpop.f32.mrb[0].mxu0
        %v819 = vadd.f32 %v686, %v818
        %v820 = vpop.f32.mrb[0].mxu0
        %v821 = vpop.f32.mrb[0].mxu0
        %v822 = vadd.f32 %v686, %v821
        %v823 = vpop.f32.mrb[0].mxu0
        %824 = vmatprep.mubr.bf16.mxu0 0
        %825 = vmatmul.mubr.bf16.gmra.mrb[0].mxu0 %v664
        %v826 = vpop.f32.mrb[0].mxu0
        %v827 = vadd.f32 %v686, %v826
        %v828 = vpop.f32.mrb[0].mxu0
        %v829 = vpop.f32.mrb[0].mxu0
        %v830 = vadd.f32 %v686, %v829
        %v831 = vpop.f32.mrb[0].mxu0
        %832 = vdwg.mxu0
        %v833 = vmax.f32 %v771, 0.0
        %v834 = vmax.f32 %v774, 0.0
        %v835 = vmax.f32 %v779, 0.0
        %v836 = vmax.f32 %v782, 0.0
        %v837 = vmax.f32 %v787, 0.0
        %v838 = vmax.f32 %v790, 0.0
        %v839 = vmax.f32 %v795, 0.0
        %v840 = vmax.f32 %v798, 0.0
        %v841 = vmax.f32 %v803, 0.0
        %v842 = vmax.f32 %v806, 0.0
        %v843 = vmax.f32 %v811, 0.0
        %v844 = vmax.f32 %v814, 0.0
        %v845 = vmax.f32 %v819, 0.0
        %v846 = vmax.f32 %v822, 0.0
        %v847 = vmax.f32 %v827, 0.0
        %v848 = vmax.f32 %v830, 0.0
        %v849 = vpack.c.bf16 %v834, %v833
        %v850 = vpack.c.bf16 %v836, %v835
        %v851 = vpack.c.bf16 %v838, %v837
        %v852 = vpack.c.bf16 %v840, %v839
        %v853 = vpack.c.bf16 %v842, %v841
        %v854 = vpack.c.bf16 %v844, %v843
        %v855 = vpack.c.bf16 %v846, %v845
        %v856 = vpack.c.bf16 %v848, %v847
        %v857 = vld [vmem:[%s334] sm:$0xf]
        %v858 = vld [vmem:[%s334 + $0x4] sm:$0xf]
        %v859 = vld [vmem:[%s334 + $0x8] sm:$0xf]
        %v860 = vld [vmem:[%s334 + $0xc] sm:$0xf]
        %v861 = vld [vmem:[%s334 + $0x10] sm:$0xf]
        %v862 = vld [vmem:[%s334 + $0x14] sm:$0xf]
        %v863 = vld [vmem:[%s334 + $0x18] sm:$0xf]
        %v864 = vld [vmem:[%s334 + $0x1c] sm:$0xf]
        %v865 = vld [vmem:[%s334 + $0x20] sm:$0xf]
        %v866 = vld [vmem:[%s334 + $0x24] sm:$0xf]
        %v867 = vld [vmem:[%s334 + $0x28] sm:$0xf]
        %v868 = vld [vmem:[%s334 + $0x2c] sm:$0xf]
        %v869 = vld [vmem:[%s334 + $0x30] sm:$0xf]
        %v870 = vld [vmem:[%s334 + $0x34] sm:$0xf]
        %v871 = vld [vmem:[%s334 + $0x38] sm:$0xf]
        %v872 = vld [vmem:[%s334 + $0x3c] sm:$0xf]
        %v873 = vld [vmem:[%s375] sm:$0x1]
        %v875 = vlaneseq
        %v876 = vshrl.u32 %v875, 7
        %v877 = vsub.s32 0, %v876
        %v878 = vrot.slane %v873, %v877
        %v896 = vunpack.c.l.b16 %v857
        %v897 = vunpack.c.l.b16 %v858
        %v898 = vunpack.c.l.b16 %v859
        %v899 = vunpack.c.l.b16 %v860
        %v900 = vunpack.c.l.b16 %v861
        %v901 = vunpack.c.l.b16 %v862
        %v902 = vunpack.c.l.b16 %v863
        %v903 = vunpack.c.l.b16 %v864
        %v904 = vunpack.c.l.b16 %v865
        %v905 = vunpack.c.l.b16 %v866
        %v906 = vunpack.c.l.b16 %v867
        %v907 = vunpack.c.l.b16 %v868
        %v908 = vunpack.c.l.b16 %v869
        %v909 = vunpack.c.l.b16 %v870
        %v910 = vunpack.c.l.b16 %v871
        %v911 = vunpack.c.l.b16 %v872
        %v912 = vpack.c.b16 %v897, %v896
        %v913 = vpack.c.b16 %v899, %v898
        %v914 = vpack.c.b16 %v901, %v900
        %v915 = vpack.c.b16 %v903, %v902
        %v916 = vpack.c.b16 %v905, %v904
        %v917 = vpack.c.b16 %v907, %v906
        %v918 = vpack.c.b16 %v909, %v908
        %v919 = vpack.c.b16 %v911, %v910
        %928 = vmatprep.subr.bf16.mxu0 0
        %929 = vmatpush1.bf16.msra.mxu0 %v912
        %930 = vmatprep.subr.bf16.mxu0 0
        %931 = vmatpush1.bf16.msra.mxu0 %v913
        %932 = vmatprep.subr.bf16.mxu0 0
        %933 = vmatpush1.bf16.msra.mxu0 %v914
        %934 = vmatprep.subr.bf16.mxu0 0
        %935 = vmatpush1.bf16.msra.mxu0 %v915
        %936 = vmatprep.subr.bf16.mxu0 0
        %937 = vmatpush1.bf16.msra.mxu0 %v916
        %938 = vmatprep.subr.bf16.mxu0 0
        %939 = vmatpush1.bf16.msra.mxu0 %v917
        %940 = vmatprep.subr.bf16.mxu0 0
        %941 = vmatpush1.bf16.msra.mxu0 %v918
        %942 = vmatprep.subr.bf16.mxu0 0
        %943 = vmatpush1.bf16.msra.mxu0 %v919
        %944 = vmatprep.subr.bf16.mxu0 0
        %945 = vmatpush1.bf16.msra.mxu0 0
        %946 = vmatprep.subr.bf16.mxu0 0
        %947 = vmatpush1.bf16.msra.mxu0 0
        %948 = vmatprep.subr.bf16.mxu0 0
        %949 = vmatpush1.bf16.msra.mxu0 0
        %950 = vmatprep.subr.bf16.mxu0 0
        %951 = vmatpush1.bf16.msra.mxu0 0
        %952 = vmatprep.subr.bf16.mxu0 0
        %953 = vmatpush1.bf16.msra.mxu0 0
        %954 = vmatprep.subr.bf16.mxu0 0
        %955 = vmatpush1.bf16.msra.mxu0 0
        %956 = vmatprep.subr.bf16.mxu0 0
        %957 = vmatpush1.bf16.msra.mxu0 0
        %958 = vmatprep.subr.bf16.mxu0 0
        %959 = vmatpush1.bf16.msra.mxu0 0
        %960 = vmatprep.mubr.bf16.mxu0 0
        %961 = vmatmul.mubr.bf16.gmra.mrb[0].mxu0 %v849
        %v962 = vpop.f32.mrb[0].mxu0
        %v963 = vadd.f32 %v878, %v962
        %v964 = vpop.f32.mrb[0].mxu0
        %v965 = vpop.f32.mrb[0].mxu0
        %v966 = vadd.f32 %v878, %v965
        %v967 = vpop.f32.mrb[0].mxu0
        %968 = vmatprep.mubr.bf16.mxu0 0
        %969 = vmatmul.mubr.bf16.gmra.mrb[0].mxu0 %v850
        %v970 = vpop.f32.mrb[0].mxu0
        %v971 = vadd.f32 %v878, %v970
        %v972 = vpop.f32.mrb[0].mxu0
        %v973 = vpop.f32.mrb[0].mxu0
        %v974 = vadd.f32 %v878, %v973
        %v975 = vpop.f32.mrb[0].mxu0
        %976 = vmatprep.mubr.bf16.mxu0 0
        %977 = vmatmul.mubr.bf16.gmra.mrb[0].mxu0 %v851
        %v978 = vpop.f32.mrb[0].mxu0
        %v979 = vadd.f32 %v878, %v978
        %v980 = vpop.f32.mrb[0].mxu0
        %v981 = vpop.f32.mrb[0].mxu0
        %v982 = vadd.f32 %v878, %v981
        %v983 = vpop.f32.mrb[0].mxu0
        %984 = vmatprep.mubr.bf16.mxu0 0
        %985 = vmatmul.mubr.bf16.gmra.mrb[0].mxu0 %v852
        %v986 = vpop.f32.mrb[0].mxu0
        %v987 = vadd.f32 %v878, %v986
        %v988 = vpop.f32.mrb[0].mxu0
        %v989 = vpop.f32.mrb[0].mxu0
        %v990 = vadd.f32 %v878, %v989
        %v991 = vpop.f32.mrb[0].mxu0
        %992 = vmatprep.mubr.bf16.mxu0 0
        %993 = vmatmul.mubr.bf16.gmra.mrb[0].mxu0 %v853
        %v994 = vpop.f32.mrb[0].mxu0
        %v995 = vadd.f32 %v878, %v994
        %v996 = vpop.f32.mrb[0].mxu0
        %v997 = vpop.f32.mrb[0].mxu0
        %v998 = vadd.f32 %v878, %v997
        %v999 = vpop.f32.mrb[0].mxu0
        %1000 = vmatprep.mubr.bf16.mxu0 0
        %1001 = vmatmul.mubr.bf16.gmra.mrb[0].mxu0 %v854
        %v1002 = vpop.f32.mrb[0].mxu0
        %v1003 = vadd.f32 %v878, %v1002
        %v1004 = vpop.f32.mrb[0].mxu0
        %v1005 = vpop.f32.mrb[0].mxu0
        %v1006 = vadd.f32 %v878, %v1005
        %v1007 = vpop.f32.mrb[0].mxu0
        %1008 = vmatprep.mubr.bf16.mxu0 0
        %1009 = vmatmul.mubr.bf16.gmra.mrb[0].mxu0 %v855
        %v1010 = vpop.f32.mrb[0].mxu0
        %v1011 = vadd.f32 %v878, %v1010
        %v1012 = vpop.f32.mrb[0].mxu0
        %v1013 = vpop.f32.mrb[0].mxu0
        %v1014 = vadd.f32 %v878, %v1013
        %v1015 = vpop.f32.mrb[0].mxu0
        %1016 = vmatprep.mubr.bf16.mxu0 0
        %1017 = vmatmul.mubr.bf16.gmra.mrb[0].mxu0 %v856
        %v1018 = vpop.f32.mrb[0].mxu0
        %v1019 = vadd.f32 %v878, %v1018
        %v1020 = vpop.f32.mrb[0].mxu0
        %v1021 = vpop.f32.mrb[0].mxu0
        %v1022 = vadd.f32 %v878, %v1021
        %v1023 = vpop.f32.mrb[0].mxu0
        %1024 = vdwg.mxu0
        %v1025 = vmax.f32 %v963, 0.0
        %v1026 = vmax.f32 %v966, 0.0
        %v1027 = vmax.f32 %v971, 0.0
        %v1028 = vmax.f32 %v974, 0.0
        %v1029 = vmax.f32 %v979, 0.0
        %v1030 = vmax.f32 %v982, 0.0
        %v1031 = vmax.f32 %v987, 0.0
        %v1032 = vmax.f32 %v990, 0.0
        %v1033 = vmax.f32 %v995, 0.0
        %v1034 = vmax.f32 %v998, 0.0
        %v1035 = vmax.f32 %v1003, 0.0
        %v1036 = vmax.f32 %v1006, 0.0
        %v1037 = vmax.f32 %v1011, 0.0
        %v1038 = vmax.f32 %v1014, 0.0
        %v1039 = vmax.f32 %v1019, 0.0
        %v1040 = vmax.f32 %v1022, 0.0
        %v1041 = vpack.c.bf16 %v1026, %v1025
        %v1042 = vpack.c.bf16 %v1028, %v1027
        %v1043 = vpack.c.bf16 %v1030, %v1029
        %v1044 = vpack.c.bf16 %v1032, %v1031
        %v1045 = vpack.c.bf16 %v1034, %v1033
        %v1046 = vpack.c.bf16 %v1036, %v1035
        %v1047 = vpack.c.bf16 %v1038, %v1037
        %v1048 = vpack.c.bf16 %v1040, %v1039
        %s1049 = smul.u32 %s25, 128
        // Predicated region
        $region65: #{tpu_custom_call.1} parent=43 // pred_check
          %p1050 = pneg %p468
        $region66: #{tpu_custom_call.1} parent=43 // pred_check_branch
          %1052 = sbr.rel (%p1050) target = $region68
        $region67: #{tpu_custom_call.1} parent=43 // pred_region
          %s1053 = sshra.s32 %s1049, 4
          %s1054 = sand.u32 %s1049, 15
          %s1055 = smul.addr %s1053, 8
          %s1056 = scalar_lea.vmem [#allocation3], %s1055
          %1057 = vst [vmem:[%s1056] sm:$0xff] %v1041
          %1058 = vst [vmem:[%s1056 + $0x8] sm:$0xff] %v1042
          %1059 = vst [vmem:[%s1056 + $0x10] sm:$0xff] %v1043
          %1060 = vst [vmem:[%s1056 + $0x18] sm:$0xff] %v1044
          %1061 = vst [vmem:[%s1056 + $0x20] sm:$0xff] %v1045
          %1062 = vst [vmem:[%s1056 + $0x28] sm:$0xff] %v1046
          %1063 = vst [vmem:[%s1056 + $0x30] sm:$0xff] %v1047
          %1064 = vst [vmem:[%s1056 + $0x38] sm:$0xff] %v1048
        $region68: #{tpu_custom_call.1} parent=43 // pred_fallthru
          _
        %p1065 = scmp.ne.s32.totalorder %s467, 0
        // Predicated region
        $region69: #{tpu_custom_call.1} parent=43 // pred_check
          %p1066 = pneg %p1065
        $region70: #{tpu_custom_call.1} parent=43 // pred_check_branch
          %1068 = sbr.rel (%p1066) target = $region72
        $region71: #{tpu_custom_call.1} parent=43 // pred_region
          %s1069 = sshra.s32 %s1049, 4
          %s1070 = sand.u32 %s1049, 15
          %s1071 = smul.addr %s1069, 8
          %s1072 = scalar_lea.vmem [#allocation2], %s1071
          %1073 = vst [vmem:[%s1072] sm:$0xff] %v1041
          %1074 = vst [vmem:[%s1072 + $0x8] sm:$0xff] %v1042
          %1075 = vst [vmem:[%s1072 + $0x10] sm:$0xff] %v1043
          %1076 = vst [vmem:[%s1072 + $0x18] sm:$0xff] %v1044
          %1077 = vst [vmem:[%s1072 + $0x20] sm:$0xff] %v1045
          %1078 = vst [vmem:[%s1072 + $0x28] sm:$0xff] %v1046
          %1079 = vst [vmem:[%s1072 + $0x30] sm:$0xff] %v1047
          %1080 = vst [vmem:[%s1072 + $0x38] sm:$0xff] %v1048
        $region72: #{tpu_custom_call.1} parent=43 // pred_fallthru
          _
        %1081 = vst [vmem:[#allocation11] sm:$0xff] %v1025
        %1082 = vst [vmem:[#allocation11 + $0x8] sm:$0xff] %v1026
        %1083 = vst [vmem:[#allocation11 + $0x10] sm:$0xff] %v1027
        %1084 = vst [vmem:[#allocation11 + $0x18] sm:$0xff] %v1028
        %1085 = vst [vmem:[#allocation11 + $0x20] sm:$0xff] %v1029
        %1086 = vst [vmem:[#allocation11 + $0x28] sm:$0xff] %v1030
        %1087 = vst [vmem:[#allocation11 + $0x30] sm:$0xff] %v1031
        %1088 = vst [vmem:[#allocation11 + $0x38] sm:$0xff] %v1032
        %1089 = vst [vmem:[#allocation11 + $0x40] sm:$0xff] %v1033
        %1090 = vst [vmem:[#allocation11 + $0x48] sm:$0xff] %v1034
        %1091 = vst [vmem:[#allocation11 + $0x50] sm:$0xff] %v1035
        %1092 = vst [vmem:[#allocation11 + $0x58] sm:$0xff] %v1036
        %1093 = vst [vmem:[#allocation11 + $0x60] sm:$0xff] %v1037
        %1094 = vst [vmem:[#allocation11 + $0x68] sm:$0xff] %v1038
        %1095 = vst [vmem:[#allocation11 + $0x70] sm:$0xff] %v1039
        %1096 = vst [vmem:[#allocation11 + $0x78] sm:$0xff] %v1040
        // Predicated region
        $region73: #{tpu_custom_call.1} parent=43 // pred_check
          %p1097 = pneg %p201
        $region74: #{tpu_custom_call.1} parent=43 // pred_check_branch
          %1099 = sbr.rel (%p1097) target = $region76
        $region75: #{tpu_custom_call.1} parent=43 // pred_region
          %s1100 = smul.u32 16, %s25
          %s1102 = ssub.s32 2048, 2048
          %1103 = vsyncadd [#allocation6], %s1102
          %s1104 = smul.addr %s1100, 128
          %s1105 = scalar_lea.hbm %s6, %s1104
          %s1106 = sshll.u32 [#allocation11], 4
          %s1107 = int_to_ptr.vmem [resolvable:$true] %s1106
          %1112 = dma.vmem_to_hbm [thread:$0]  %s1107, 2048, %s1105, [#allocation6], 128, 128, 8
        $region76: #{tpu_custom_call.1} parent=43 // pred_fallthru
          _
        // Predicated region
        $region77: #{tpu_custom_call.1} parent=43 // pred_check
          %p1113 = pneg %p201
        $region78: #{tpu_custom_call.1} parent=43 // pred_check_branch
          %1115 = sbr.rel (%p1113) target = $region80
        $region79: #{tpu_custom_call.1} parent=43 // pred_region
          %1116 = dma.done [#allocation6], 2048
        $region80: #{tpu_custom_call.1} parent=43 // pred_fallthru
          _
      $region44: #{tpu_custom_call.1} parent=5 // pred_fallthru
        _
      %p1117 = scmp.le.s32.totalorder 2, %s15
      // Predicated region
      $region81: #{tpu_custom_call.1} parent=5 // pred_check
        %p1118 = pneg %p1117
      $region82: #{tpu_custom_call.1} parent=5 // pred_check_branch
        %1120 = sbr.rel (%p1118) target = $region84
      $region83: #{tpu_custom_call.1} parent=5 // pred_region
        %s1121 = ssub.s32 %s15, 2
      $region84: #{tpu_custom_call.1} parent=5 // pred_fallthru
        _
    $region6: #{tpu_custom_call.1} parent=1 // loop_footer
      %s19 = sadd.s32 1, %s15
    $region7: #{tpu_custom_call.1} parent=1 // loop_footer_branch
      %14 = sbr.rel target = $region3
    $region8: #{tpu_custom_call.1} parent=1 // loop_exit
      _
    %1122 = vsyncpa [#allocation5], 1
    %s1123 = scalar_lea.sflag [#allocation5], 1
    %1124 = vsyncpa %s1123, 1
    %1125 = vsyncpa [#allocation8], 1
    %1126 = vsyncpa [#allocation6], 1
    %s1127 = scalar_lea.sflag [#allocation6], 1
    %1128 = vsyncpa %s1127, 1

</llo_original>
